<compile_context>
chip_gen: v5e
topology: v5e:2x2
jax: 0.10.0
libtpu: 0.0.40
codegen_flags: <defaults>
</compile_context>

<pallas_src>
import functools

import jax
import jax.numpy as jnp
from jax.experimental import pallas as pl
from jax.experimental.pallas import tpu as pltpu


# ----------------------------------------------------------------------------
# small helpers (all evaluated eagerly at import time, never under a trace)
# ----------------------------------------------------------------------------
def _round_up(x, m):
    return (x + m - 1) // m * m


def _vmem_limit_bytes():
    """Scoped-VMEM limit, clamped to the chip's physical capacity (v7x-safe)."""
    try:
        cap = int(pltpu.get_tpu_info().vmem_capacity_bytes)
    except Exception:
        cap = 64 * 1024 * 1024            # conservative (v7x per-core VMEM)
    return min(cap * 3 // 4, 100 * 1024 * 1024)


_VMEM_LIMIT = _vmem_limit_bytes()
_VMEM_BUDGET = int(_VMEM_LIMIT * 0.55)    # headroom for compiler temps / relayouts


def _probe_buffered1():
    """Probe (eagerly, at import -- never under a jit trace) whether
    single-buffered constant operands via pl.Buffered(1) work correctly."""
    try:
        spec = pl.BlockSpec((8, 128), lambda i: (0, 0),
                            pipeline_mode=pl.Buffered(1))

        def k(x_ref, o_ref):
            o_ref[...] = x_ref[...] * 2.0

        x = jnp.arange(8 * 128, dtype=jnp.float32).reshape(8, 128)
        y = pl.pallas_call(
            k, out_shape=jax.ShapeDtypeStruct((16, 128), jnp.float32),
            grid=(2,), in_specs=[spec],
            out_specs=pl.BlockSpec((8, 128), lambda i: (i, 0)))(x)
        ok = jnp.allclose(y, jnp.concatenate([x, x], axis=0) * 2.0)
        return bool(jax.device_get(ok))
    except Exception:
        return False


# Eager, import-time probe: fixes the previous silent fallback under jit.
_BUFFERED1_OK = _probe_buffered1()


def _const_spec(shape, grid_rank):
    """BlockSpec for an operand identical at every grid step (weights / BN).

    Single-buffered when supported so only one VMEM copy of the weights is
    resident (matters on v7x's 64 MiB VMEM); otherwise the default.
    """
    zeros = (0,) * len(shape)
    if grid_rank == 1:
        imap = lambda i: zeros
    else:
        imap = lambda i, j: zeros
    if _BUFFERED1_OK:
        return pl.BlockSpec(shape, imap, pipeline_mode=pl.Buffered(1))
    return pl.BlockSpec(shape, imap)


# ----------------------------------------------------------------------------
# Kernel A:  h = relu((a @ w) * scale + bias)        (1x1 conv + BN + ReLU)
#   bf16 operands (MXU-native), f32 accumulation + epilogue, bf16 store.
# ----------------------------------------------------------------------------
def _mm_bn_relu_kernel(a_ref, w_ref, s_ref, b_ref, o_ref):
    acc = jnp.dot(a_ref[...], w_ref[...], preferred_element_type=jnp.float32)
    o_ref[...] = jnp.maximum(acc * s_ref[...] + b_ref[...], 0.0).astype(o_ref.dtype)


def _pick_mm_rows(M, K, C):
    wbuf = 1 if _BUFFERED1_OK else 2

    def est(tm):
        return (2 * tm * K * 2 + 2 * tm * C * 2      # in/out blocks (x2 buffers)
                + wbuf * K * C * 2                   # weights
                + tm * C * 4)                        # f32 epilogue temp

    tm = min(_round_up(M, 8), 4096)
    while tm > 8 and est(tm) > _VMEM_BUDGET:
        tm = max(8, _round_up(tm // 2, 8))
    return tm


def conv1x1_bn_relu(a, w, scale, bias, *, out_dtype=jnp.bfloat16):
    """a: (M, K), w: (K, C), scale/bias: (C,) -> (M, C) in `out_dtype`."""
    M, K = a.shape
    _, C = w.shape
    tm = _pick_mm_rows(M, K, C)
    Mp = _round_up(M, tm)
    a = a.astype(jnp.bfloat16)
    if Mp != M:
        a = jnp.pad(a, ((0, Mp - M), (0, 0)))
    w = w.astype(jnp.bfloat16)
    scale2 = scale.reshape(1, C).astype(jnp.float32)
    bias2 = bias.reshape(1, C).astype(jnp.float32)

    cost = pl.CostEstimate(
        flops=2 * Mp * K * C, transcendentals=0,
        bytes_accessed=Mp * K * 2 + K * C * 2 + Mp * C * jnp.dtype(out_dtype).itemsize)

    out = pl.pallas_call(
        _mm_bn_relu_kernel,
        out_shape=jax.ShapeDtypeStruct((Mp, C), out_dtype),
        grid=(Mp // tm,),
        in_specs=[
            pl.BlockSpec((tm, K), lambda i: (i, 0)),
            _const_spec((K, C), 1),
            _const_spec((1, C), 1),
            _const_spec((1, C), 1),
        ],
        out_specs=pl.BlockSpec((tm, C), lambda i: (i, 0)),
        compiler_params=pltpu.CompilerParams(
            dimension_semantics=("parallel",),
            vmem_limit_bytes=_VMEM_LIMIT),
        cost_estimate=cost,
    )(a, w, scale2, bias2)
    return out[:M] if Mp != M else out


# ----------------------------------------------------------------------------
# Kernel B: fused  conv2(3x3, stride, pad=1)+BN2+ReLU + conv3(1x1)+BN3
#                  + residual (identity or 1x1-stride downsample conv+BNd)
#                  + ReLU, bf16 store.
# One grid step = `th` output rows of one image.  The strided 3x3 conv reads a
# non-overlapping body block of the space-to-batch (parity) layout plus a tiny
# halo block, im2cols the 9 taps in VMEM and runs ONE K=9*Cmid matmul.
# ----------------------------------------------------------------------------
def _bottleneck_tail_kernel(*refs, stride, th, wo, ext, cmid, has_down):
    if has_down:
        (body_ref, halo_ref, w2_ref, s2_ref, b2_ref, w3_ref, s3_ref, b3_ref,
         res_ref, wd_ref, sd_ref, o_ref) = refs
    else:
        (body_ref, halo_ref, w2_ref, s2_ref, b2_ref, w3_ref, s3_ref, b3_ref,
         res_ref, o_ref) = refs
        wd_ref = sd_ref = None

    s = stride
    rows = th * wo

    # Rebuild the (th+ext)-row parity planes in VMEM from the non-overlapping
    # body block plus the tiny halo block (no halo duplication in HBM).
    planes = []
    for par in range(s * s):
        body_p = body_ref[0, par]                          # (th,  Wq, Cmid)
        halo_p = halo_ref[0, 0, par * ext:(par + 1) * ext]  # (ext, Wq, Cmid)
        planes.append(jnp.concatenate([body_p, halo_p], axis=0))

    # conv2 (3x3, stride): im2col the 9 taps -> (rows, 9*Cmid) bf16 slab and a
    # single MXU matmul (better K-utilization on the 256-deep v6e/v7x MXU).
    taps = []
    for kh in range(3):
        for kw in range(3):
            par = (kh % s) * s + (kw % s)                  # parity plane
            dh, dw = kh // s, kw // s                      # in-plane shift
            win = planes[par][dh:dh + th, dw:dw + wo, :]
            taps.append(win.reshape(rows, cmid))
    slab = jnp.concatenate(taps, axis=-1)                  # (rows, 9*Cmid)
    acc2 = jnp.dot(slab, w2_ref[...], preferred_element_type=jnp.float32)
    h2 = jnp.maximum(acc2 * s2_ref[...] + b2_ref[...], 0.0)        # BN2+ReLU

    # conv3 (1x1) + BN3 (b3 already has the downsample BN bias folded in).
    out = jnp.dot(h2.astype(jnp.bfloat16), w3_ref[...],
                  preferred_element_type=jnp.float32) * s3_ref[...] + b3_ref[...]

    # residual branch
    if has_down:          # 1x1 stride-s conv + BN on the pre-strided input
        out = out + jnp.dot(res_ref[...], wd_ref[...],
                            preferred_element_type=jnp.float32) * sd_ref[...]
    else:                 # identity shortcut (bf16 operand, f32 add)
        out = out + res_ref[...].astype(jnp.float32)

    o_ref[...] = jnp.maximum(out, 0.0).astype(o_ref.dtype)         # bf16 store


# ----------------------------------------------------------------------------
# layout-only glue (zero FLOPs): weight reshapes, folded BN, tile sizing
# ----------------------------------------------------------------------------
def _w_1x1(w_oihw):
    cout, cin = w_oihw.shape[:2]
    return w_oihw.reshape(cout, cin).T                     # (cin, cout)


def _w_3x3_im2col(w_oihw):
    cout, cin, kh, kw = w_oihw.shape
    return jnp.transpose(w_oihw, (2, 3, 1, 0)).reshape(kh * kw * cin, cout)


def _fold_bn(gamma, beta, mean, var, eps=1e-5):
    scale = gamma / jnp.sqrt(var + eps)
    return scale, beta - mean * scale


def _pick_tail_rows(N, Ho, Wo, Wq, s, ext, Cmid, Cout, Cres, has_down):
    """Output rows per grid step: multiple of 8, ~2k-4k flattened rows, VMEM-aware."""
    wbuf = 1 if _BUFFERED1_OK else 2
    wbytes = (9 * Cmid * Cmid * 2 + Cmid * Cout * 2
              + (Cres * Cout * 2 if has_down else 0))

    def est(th):
        rows = th * Wo
        b = 2 * (s * s) * th * Wq * Cmid * 2       # body blocks (x2 buffers)
        b += 2 * (s * s) * ext * Wq * Cmid * 2     # halo blocks
        b += 2 * rows * Cres * 2                   # residual blocks
        b += 2 * rows * Cout * 2                   # output blocks
        b += 2 * rows * 9 * Cmid * 2               # im2col slab (+ relayout temp)
        b += rows * Cmid * 4                       # h2 (f32)
        b += rows * Cout * 4                       # f32 epilogue temp
        b += wbuf * wbytes
        return b

    th_cap = _round_up(Ho, 8)
    th = min(th_cap, max(8, _round_up(pl.cdiv(4096, max(Wo, 1)), 8)))
    while th > 8 and est(th) > _VMEM_BUDGET:
        th -= 8
    # keep >=2 grid steps so both v7x TensorCores get work / pipeline depth
    if N * pl.cdiv(Ho, th) < 2 and Ho > 8:
        th = max(8, _round_up(pl.cdiv(Ho, 2), 8))
    return th


# ----------------------------------------------------------------------------
# BottleneckBlock forward (with_dcn=False)
# ----------------------------------------------------------------------------
def bottleneck_forward(x_nchw, p, stride):
    s = int(stride)
    assert s in (1, 2), "ResNet bottleneck uses stride 1 or 2"
    # one XLA pass: NCHW -> NHWC + bf16 cast; the same x feeds conv1 + residual
    x = jnp.transpose(x_nchw, (0, 2, 3, 1)).astype(jnp.bfloat16)
    N, H, W, Cin = x.shape
    Cmid = p["w1_oihw"].shape[0]
    Cout = p["w3_oihw"].shape[0]
    has_down = s > 1 or Cin != Cout

    # ---- 1) conv1 (1x1) + BN1 + ReLU (kernel A); h1 stored bf16 -------------
    h1 = conv1x1_bn_relu(x.reshape(N * H * W, Cin), _w_1x1(p["w1_oihw"]),
                         p["s1"], p["b1"])
    h1 = h1.reshape(N, H, W, Cmid)

    # ---- 2) geometry of conv2 (k=3, pad=1, stride=s) -------------------------
    Ho = (H - 1) // s + 1
    Wo = (W - 1) // s + 1
    ext = 2 // s                     # extra rows/cols per parity plane
    Wq = Wo + ext
    Cres = Cin if has_down else Cout
    th = _pick_tail_rows(N, Ho, Wo, Wq, s, ext, Cmid, Cout, Cres, has_down)
    n_rt = pl.cdiv(Ho, th)           # row tiles per image
    Ho_p = n_rt * th
    Hrows = Ho_p + ext               # rows per parity plane (incl. halo pad)

    # Space-to-batch ("parity") layout of the zero-padded h1: every (kh,kw) tap
    # of the strided 3x3 conv is a contiguous window of one parity plane.  For
    # s=1 the transpose is a no-op (pure pad).
    h1p = jnp.pad(h1, ((0, 0), (1, s * Hrows - H - 1), (1, s * Wq - W - 1), (0, 0)))
    h1q = (h1p.reshape(N, Hrows, s, Wq, s, Cmid)
               .transpose(0, 2, 4, 1, 3, 5)
               .reshape(N, s * s, Hrows, Wq, Cmid))
    # Tiny per-tile halo (ext rows per parity plane) gathered separately so the
    # big body tensor is tiled with NON-overlapping blocks (no stack round trip).
    halo_idx = (jnp.arange(n_rt)[:, None] + 1) * th + jnp.arange(ext)[None, :]
    halo = h1q[:, :, halo_idx]                       # (N, s*s, n_rt, ext, Wq, C)
    halo = (jnp.transpose(halo, (0, 2, 1, 3, 4, 5))
                .reshape(N, n_rt, s * s * ext, Wq, Cmid))

    # ---- residual branch (bf16 operand for both paths) -----------------------
    res4 = x[:, ::s, ::s, :] if has_down else x
    if Ho_p > Ho:
        res4 = jnp.pad(res4, ((0, 0), (0, Ho_p - Ho), (0, 0), (0, 0)))
    res2 = res4.reshape(N * Ho_p * Wo, Cres)

    # ---- weights / folded BN params for kernel B ------------------------------
    w2 = _w_3x3_im2col(p["w2_oihw"]).astype(jnp.bfloat16)   # (9*Cmid, Cmid)
    w3 = _w_1x1(p["w3_oihw"]).astype(jnp.bfloat16)          # (Cmid, Cout)
    s2 = p["s2"].reshape(1, Cmid).astype(jnp.float32)
    b2 = p["b2"].reshape(1, Cmid).astype(jnp.float32)
    s3 = p["s3"].reshape(1, Cout).astype(jnp.float32)
    b3 = p["b3"].astype(jnp.float32)
    if has_down:
        b3 = b3 + p["bd"].astype(jnp.float32)               # fold both BN biases
    b3 = b3.reshape(1, Cout)

    TB = th * Wo                                            # output rows / step
    in_specs = [
        pl.BlockSpec((1, s * s, th, Wq, Cmid), lambda n, r: (n, 0, r, 0, 0)),
        pl.BlockSpec((1, 1, s * s * ext, Wq, Cmid), lambda n, r: (n, r, 0, 0, 0)),
        _const_spec((9 * Cmid, Cmid), 2),
        _const_spec((1, Cmid), 2),
        _const_spec((1, Cmid), 2),
        _const_spec((Cmid, Cout), 2),
        _const_spec((1, Cout), 2),
        _const_spec((1, Cout), 2),
        pl.BlockSpec((TB, Cres), lambda n, r: (n * n_rt + r, 0)),
    ]
    args = [h1q, halo, w2, s2, b2, w3, s3, b3, res2]
    if has_down:
        in_specs += [_const_spec((Cin, Cout), 2), _const_spec((1, Cout), 2)]
        args += [_w_1x1(p["wd_oihw"]).astype(jnp.bfloat16),
                 p["sd"].reshape(1, Cout).astype(jnp.float32)]

    flops_per_row = 2 * Cmid * (9 * Cmid + Cout) + (2 * Cres * Cout if has_down else 0)
    cost = pl.CostEstimate(
        flops=N * Ho_p * Wo * flops_per_row, transcendentals=0,
        bytes_accessed=(h1q.size * 2 + halo.size * 2 + w2.size * 2 + w3.size * 2
                        + res2.size * 2 + N * Ho_p * Wo * Cout * 2))

    out2 = pl.pallas_call(
        functools.partial(_bottleneck_tail_kernel, stride=s, th=th, wo=Wo,
                          ext=ext, cmid=Cmid, has_down=has_down),
        out_shape=jax.ShapeDtypeStruct((N * Ho_p * Wo, Cout), jnp.bfloat16),
        grid=(N, n_rt),
        in_specs=in_specs,
        out_specs=pl.BlockSpec((TB, Cout), lambda n, r: (n * n_rt + r, 0)),
        compiler_params=pltpu.CompilerParams(
            dimension_semantics=("parallel", "parallel"),
            vmem_limit_bytes=_VMEM_LIMIT),
        cost_estimate=cost,
    )(*args)

    out = out2.reshape(N, Ho_p, Wo, Cout)[:, :Ho]
    # NHWC -> NCHW + f32 cast in one XLA pass (module interface is f32).
    return jnp.transpose(out, (0, 3, 1, 2)).astype(jnp.float32)


# ----------------------------------------------------------------------------
# Deterministic parameter init (shapes follow the PyTorch module's __init__)
# ----------------------------------------------------------------------------
def init_params(key, in_channel, out_channel):
    inner = out_channel // 4
    ks = jax.random.split(key, 8)

    def conv_w(k, cout, cin, kh, kw):
        return 0.1 * jax.random.normal(k, (cout, cin, kh, kw), jnp.float32)

    def bn_params(k, c):
        k1, k2, k3, k4 = jax.random.split(k, 4)
        gamma = 0.5 + jax.random.uniform(k1, (c,), jnp.float32)
        beta = 0.1 * jax.random.normal(k2, (c,), jnp.float32)
        mean = 0.1 * jax.random.normal(k3, (c,), jnp.float32)
        var = 0.5 + jax.random.uniform(k4, (c,), jnp.float32)
        return _fold_bn(gamma, beta, mean, var)

    p = {}
    p["w1_oihw"] = conv_w(ks[0], inner, in_channel, 1, 1)
    p["s1"], p["b1"] = bn_params(ks[1], inner)
    p["w2_oihw"] = conv_w(ks[2], inner, inner, 3, 3)
    p["s2"], p["b2"] = bn_params(ks[3], inner)
    p["w3_oihw"] = conv_w(ks[4], out_channel, inner, 1, 1)
    p["s3"], p["b3"] = bn_params(ks[5], out_channel)
    p["wd_oihw"] = conv_w(ks[6], out_channel, in_channel, 1, 1)
    p["sd"], p["bd"] = bn_params(ks[7], out_channel)
    return p


# ----------------------------------------------------------------------------
# Pure-JAX reference (XLA convs, f32 HIGHEST) for validation
# ----------------------------------------------------------------------------
def _conv2d_nchw(x, w_oihw, stride=1, padding=0):
    return jax.lax.conv_general_dilated(
        x, w_oihw, window_strides=(stride, stride),
        padding=[(padding, padding), (padding, padding)],
        dimension_numbers=("NCHW", "OIHW", "NCHW"),
        precision=jax.lax.Precision.HIGHEST)


def reference_forward(x, p, stride, has_down):
    def bn(y, sc, b):
        return y * sc[None, :, None, None] + b[None, :, None, None]
    out = jax.nn.relu(bn(_conv2d_nchw(x, p["w1_oihw"]), p["s1"], p["b1"]))
    out = jax.nn.relu(bn(_conv2d_nchw(out, p["w2_oihw"], stride, 1), p["s2"], p["b2"]))
    out = bn(_conv2d_nchw(out, p["w3_oihw"]), p["s3"], p["b3"])
    res = bn(_conv2d_nchw(x, p["wd_oihw"], stride), p["sd"], p["bd"]) if has_down else x
    return jax.nn.relu(out + res)


if __name__ == "__main__":
    key = jax.random.PRNGKey(0)
    k1, k2, k3, k4 = jax.random.split(key, 4)

    # Config A: projection shortcut (stride=2, channel expansion).
    N, H, W = 2, 16, 16
    in_c, out_c, stride = 64, 256, 2
    x = jax.random.normal(k1, (N, in_c, H, W), jnp.float32)
    params = init_params(k2, in_c, out_c)
    out = jax.block_until_ready(bottleneck_forward(x, params, stride))
    ref = reference_forward(x, params, stride, has_down=True)
    assert out.shape == ref.shape, (out.shape, ref.shape)
    err_a = float(jnp.max(jnp.abs(out - ref)))
    tol_a = 2.5e-2 * max(1.0, float(jnp.max(jnp.abs(ref))))

    # Config B: identity shortcut (stride=1, in == out channels).
    x2 = jax.random.normal(k3, (N, 256, H, W), jnp.float32)
    params2 = init_params(k4, 256, 256)
    out2 = jax.block_until_ready(bottleneck_forward(x2, params2, 1))
    ref2 = reference_forward(x2, params2, 1, has_down=False)
    assert out2.shape == ref2.shape, (out2.shape, ref2.shape)
    err_b = float(jnp.max(jnp.abs(out2 - ref2)))
    tol_b = 2.5e-2 * max(1.0, float(jnp.max(jnp.abs(ref2))))

    if not (err_a < tol_a and err_b < tol_b):
        raise AssertionError(
            f"mismatch vs reference: err_a={err_a:.4g} (tol {tol_a:.4g}), "
            f"err_b={err_b:.4g} (tol {tol_b:.4g})")
    print("KERNEL_OK")
</pallas_src>

<mosaic_0001>
module attributes {stable_mosaic.version = 11 : i64} {
  func.func @k(%arg0: i32, %arg1: memref<8x128xf32, #tpu.memory_space<vmem>>, %arg2: memref<8x128xf32, #tpu.memory_space<vmem>>) attributes {dimension_semantics = [#tpu.dimension_semantics<arbitrary>], iteration_bounds = array<i64: 2>, scalar_prefetch = 0 : i64, scratch_operands = 0 : i64, tpu.core_type = #tpu.core_type<tc>, window_params = [{pipeline_mode = #tpu.pipeline_mode<synchronous>, transform_indices = @transform_0, window_bounds = array<i64: 8, 128>}, {transform_indices = @transform_1, window_bounds = array<i64: 8, 128>}]} {
    %c0 = arith.constant 0 : index
    %c0_0 = arith.constant 0 : index
    %0 = vector.load %arg1[%c0, %c0_0] : memref<8x128xf32, #tpu.memory_space<vmem>>, vector<8x128xf32>
    %cst = arith.constant 2.000000e+00 : f32
    %1 = vector.broadcast %cst : f32 to vector<8x128xf32>
    %2 = arith.mulf %0, %1 : vector<8x128xf32>
    %c0_1 = arith.constant 0 : index
    %c0_2 = arith.constant 0 : index
    %3 = vector.load %arg2[%c0_1, %c0_2] : memref<8x128xf32, #tpu.memory_space<vmem>>, vector<8x128xf32>
    tpu.vector_store %arg2[%c0_1, %c0_2], %2 {strides = array<i32>} : memref<8x128xf32, #tpu.memory_space<vmem>>, vector<8x128xf32>,
    return
  }
  func.func @transform_0(%arg0: i32) -> (i32, i32) {
    %c0_i32 = arith.constant 0 : i32
    %c0_i32_0 = arith.constant 0 : i32
    %c0_i32_1 = arith.constant 0 : i32
    return %c0_i32, %c0_i32_0 : i32, i32
  }
  func.func @transform_1(%arg0: i32) -> (i32, i32) {
    %c0_i32 = arith.constant 0 : i32
    %c0_i32_0 = arith.constant 0 : i32
    return %arg0, %c0_i32 : i32, i32
  }
}

module attributes {stable_mosaic.version = 11 : i64} {
  func.func @_mm_bn_relu_kernel(%arg0: i32, %arg1: memref<512x64xbf16, #tpu.memory_space<vmem>>, %arg2: memref<64x64xbf16, #tpu.memory_space<vmem>>, %arg3: memref<1x64xf32, #tpu.memory_space<vmem>>, %arg4: memref<1x64xf32, #tpu.memory_space<vmem>>, %arg5: memref<512x64xbf16, #tpu.memory_space<vmem>>) attributes {dimension_semantics = [#tpu.dimension_semantics<parallel>], iteration_bounds = array<i64: 1>, scalar_prefetch = 0 : i64, scratch_operands = 0 : i64, tpu.core_type = #tpu.core_type<tc>, window_params = [{transform_indices = @transform_0, window_bounds = array<i64: 512, 64>}, {pipeline_mode = #tpu.pipeline_mode<synchronous>, transform_indices = @transform_1, window_bounds = array<i64: 64, 64>}, {pipeline_mode = #tpu.pipeline_mode<synchronous>, transform_indices = @transform_2, window_bounds = array<i64: 1, 64>}, {pipeline_mode = #tpu.pipeline_mode<synchronous>, transform_indices = @transform_3, window_bounds = array<i64: 1, 64>}, {transform_indices = @transform_4, window_bounds = array<i64: 512, 64>}]} {
    %c0 = arith.constant 0 : index
    %c0_0 = arith.constant 0 : index
    %0 = vector.load %arg1[%c0, %c0_0] : memref<512x64xbf16, #tpu.memory_space<vmem>>, vector<512x64xbf16>
    %c0_1 = arith.constant 0 : index
    %c0_2 = arith.constant 0 : index
    %1 = vector.load %arg2[%c0_1, %c0_2] : memref<64x64xbf16, #tpu.memory_space<vmem>>, vector<64x64xbf16>
    %cst = arith.constant dense<0.000000e+00> : vector<512x64xf32>
    %2 = tpu.matmul %0, %1, %cst {dimension_numbers = #tpu.dot_dimension_numbers<[1], [0], [0], [1], [0, 0, 1, 1], [], []>} : vector<512x64xbf16>, vector<64x64xbf16>, vector<512x64xf32> -> vector<512x64xf32>
    %c0_3 = arith.constant 0 : index
    %c0_4 = arith.constant 0 : index
    %3 = vector.load %arg3[%c0_3, %c0_4] : memref<1x64xf32, #tpu.memory_space<vmem>>, vector<1x64xf32>
    %4 = vector.broadcast %3 : vector<1x64xf32> to vector<512x64xf32>
    %5 = arith.mulf %2, %4 : vector<512x64xf32>
    %c0_5 = arith.constant 0 : index
    %c0_6 = arith.constant 0 : index
    %6 = vector.load %arg4[%c0_5, %c0_6] : memref<1x64xf32, #tpu.memory_space<vmem>>, vector<1x64xf32>
    %7 = vector.broadcast %6 : vector<1x64xf32> to vector<512x64xf32>
    %8 = arith.addf %5, %7 : vector<512x64xf32>
    %cst_7 = arith.constant 0.000000e+00 : f32
    %9 = vector.broadcast %cst_7 : f32 to vector<512x64xf32>
    %10 = arith.maximumf %8, %9 : vector<512x64xf32>
    %11 = arith.truncf %10 : vector<512x64xf32> to vector<512x64xbf16>
    %c0_8 = arith.constant 0 : index
    %c0_9 = arith.constant 0 : index
    %12 = vector.load %arg5[%c0_8, %c0_9] : memref<512x64xbf16, #tpu.memory_space<vmem>>, vector<512x64xbf16>
    tpu.vector_store %arg5[%c0_8, %c0_9], %11 {strides = array<i32>} : memref<512x64xbf16, #tpu.memory_space<vmem>>, vector<512x64xbf16>,
    return
  }
  func.func @transform_0(%arg0: i32) -> (i32, i32) {
    %c0_i32 = arith.constant 0 : i32
    %c0_i32_0 = arith.constant 0 : i32
    return %arg0, %c0_i32 : i32, i32
  }
  func.func @transform_1(%arg0: i32) -> (i32, i32) {
    %c0_i32 = arith.constant 0 : i32
    %c0_i32_0 = arith.constant 0 : i32
    %c0_i32_1 = arith.constant 0 : i32
    return %c0_i32, %c0_i32_0 : i32, i32
  }
  func.func @transform_2(%arg0: i32) -> (i32, i32) {
    %c0_i32 = arith.constant 0 : i32
    %c0_i32_0 = arith.constant 0 : i32
    %c0_i32_1 = arith.constant 0 : i32
    return %c0_i32, %c0_i32_0 : i32, i32
  }
  func.func @transform_3(%arg0: i32) -> (i32, i32) {
    %c0_i32 = arith.constant 0 : i32
    %c0_i32_0 = arith.constant 0 : i32
    %c0_i32_1 = arith.constant 0 : i32
    return %c0_i32, %c0_i32_0 : i32, i32
  }
  func.func @transform_4(%arg0: i32) -> (i32, i32) {
    %c0_i32 = arith.constant 0 : i32
    %c0_i32_0 = arith.constant 0 : i32
    return %arg0, %c0_i32 : i32, i32
  }
}

</mosaic_0001>

<llo_original>
// kernel: tpu_custom_call.1
$region0: #{tpu_custom_call.1}
  #allocation0 [shape = 'u32[]', space=smem, size = 0x4, offset = 0x4, fixed_abs, tag = 'smem constant byte address 0x4 - core index']
  #allocation1 [shape = 'u32[72,128]{1,0:T(1,128)}', space=vmem, size = 0x9000, scoped, tag = 'internal scratch']
  %s0 = inlined_call_operand.hbm [shape: f32[8,128], index: 0, kind: input, shape index: {}]
  %s1 = inlined_call_operand.hbm [shape: f32[16,128], index: 1, kind: output, shape index: {}]
  %s2 = sld [smem:[#allocation0]]
  $region41: #{tpu_custom_call.1} parent=0
    _
  %s4 = ssub.s32 1, %s2
  %s5 = scalar_select 0, %s4, %s2
  $region1: #{tpu_custom_call.1} parent=0
    #allocation2 [shape = 'u8[4096]{0}', space=vmem, size = 0x1000, scoped, tag = 'input window, operand 0, single buffered']
    #allocation3 [shape = 's32[2]{0}', space=sflag, size = 0x8, scoped, tag = 'scoped memory for tpu_custom_call.1']
    #allocation4 [shape = 's32[2]{0}', space=sflag, size = 0x8, scoped, tag = 'scoped memory for tpu_custom_call.1']
    #allocation5 [shape = 'u8[8192]{0}', space=vmem, size = 0x2000, scoped, tag = 'output window, operand 0']
    %6 = vsyncpa [#allocation3], 0
    %7 = vsyncpa [#allocation4], 0
    %s8 = scalar_lea.sflag [#allocation4], 1
    %9 = vsyncpa %s8, 0
    loop: start=0, step=1, limit=4
    $region2: #{tpu_custom_call.1} parent=1 // loop_pre_header
      _
    $region3: #{tpu_custom_call.1} parent=1 // loop_header
      %s11 = sphi 0, %s15
      %p12 = scmp.ge.s32.totalorder %s11, 4
      %s19 = sphi 0, %s19
      %s21 = sphi 0, %s19
      %s22 = sphi 0, %s21
      %s36 = sphi 0, %s22
      %s42 = sphi 0, %s44
      %s45 = sphi 0, %s42
      %s46 = sphi 0, %s45
      %s62 = sphi 0, %s46
    $region4: #{tpu_custom_call.1} parent=1 // loop_header_branch
      %14 = sbr.rel (%p12) target = $region8
    $region5: #{tpu_custom_call.1} parent=1 // loop_body
      %s16 = ssub.s32 %s11, 1
      %s17 = ssub.s32 %s11, 2
      %s18 = sadd.s32 %s11, 1
      %s20 = sadd.s32 %s19, 1
      %p23 = scmp.eq.s32.totalorder %s11, 1
      %p24 = scmp.ne.s32.totalorder %s19, %s21
      %p25 = scmp.eq.s32.totalorder %s11, 0
      %p26 = por %p24, %p25
      %p27 = scmp.ne.s32.totalorder %s19, %s21
      %p28 = scmp.eq.s32.totalorder %s16, 1
      %p29 = por %p27, %p28
      %p30 = scmp.ne.s32.totalorder %s21, %s22
      %p31 = scmp.eq.s32.totalorder %s16, 0
      %p32 = por %p30, %p31
      %p33 = scmp.ne.s32.totalorder %s21, %s22
      %p34 = scmp.eq.s32.totalorder %s17, 1
      %p35 = por %p33, %p34
      %p37 = scmp.ne.s32.totalorder %s22, %s36
      %p38 = scmp.eq.s32.totalorder %s17, 0
      %p39 = por %p37, %p38
      %s40 = ssub.s32 %s11, %s18
      %p41 = scmp.eq.s32.totalorder %s40, 0
      %s43 = sadd.s32 %s42, 1
      %s44 = scalar_select %p41, %s42, %s43
      %p47 = pneg %p41
      %p48 = scmp.eq.s32.totalorder %s11, 1
      %p49 = por %p47, %p48
      %p50 = scmp.ne.s32.totalorder %s42, %s45
      %p51 = scmp.eq.s32.totalorder %s11, 0
      %p52 = por %p50, %p51
      %p53 = scmp.ne.s32.totalorder %s42, %s45
      %p54 = scmp.eq.s32.totalorder %s16, 1
      %p55 = por %p53, %p54
      %p56 = scmp.ne.s32.totalorder %s45, %s46
      %p57 = scmp.eq.s32.totalorder %s16, 0
      %p58 = por %p56, %p57
      %p59 = scmp.ne.s32.totalorder %s45, %s46
      %p60 = scmp.eq.s32.totalorder %s17, 1
      %p61 = por %p59, %p60
      %p63 = scmp.ne.s32.totalorder %s46, %s62
      %p64 = scmp.eq.s32.totalorder %s17, 0
      %p65 = por %p63, %p64
      %p66 = scmp.le.s32.totalorder 1, %s11
      %p67 = scmp.lt.s32.totalorder %s11, 3
      %p68 = pnand %p66, %p67
      %p69 = pneg %p68
      // Predicated region
      $region9: #{tpu_custom_call.1} parent=5 // pred_check
        _
      $region10: #{tpu_custom_call.1} parent=5 // pred_check_branch
        %71 = sbr.rel (%p68) target = $region12
      $region11: #{tpu_custom_call.1} parent=5 // pred_region
        %s72 = ssub.s32 %s11, 1
        // Predicated region
        $region13: #{tpu_custom_call.1} parent=11 // pred_check
          %p73 = pneg %p32
        $region14: #{tpu_custom_call.1} parent=11 // pred_check_branch
          %75 = sbr.rel (%p73) target = $region16
        $region15: #{tpu_custom_call.1} parent=11 // pred_region
          %77 = vsyncadd [#allocation3], 0
          %s79 = sshll.u32 %s0, 4
          %s80 = int_to_ptr.hbm [resolvable:$true] %s79
          %s81 = sshll.u32 [#allocation2], 4
          %s82 = int_to_ptr.vmem [resolvable:$true] %s81
          %84 = dma.hbm_to_vmem [thread:$0]  %s80, 128, %s82, [#allocation3]
        $region16: #{tpu_custom_call.1} parent=11 // pred_fallthru
          _
      $region12: #{tpu_custom_call.1} parent=5 // pred_fallthru
        _
      %p85 = scmp.lt.s32.totalorder %s11, 2
      // Predicated region
      $region17: #{tpu_custom_call.1} parent=5 // pred_check
        %p86 = pneg %p85
      $region18: #{tpu_custom_call.1} parent=5 // pred_check_branch
        %88 = sbr.rel (%p86) target = $region20
      $region19: #{tpu_custom_call.1} parent=5 // pred_region
        _
      $region20: #{tpu_custom_call.1} parent=5 // pred_fallthru
        _
      %p89 = scmp.le.s32.totalorder 1, %s11
      %p90 = scmp.lt.s32.totalorder %s11, 3
      %p91 = pnand %p89, %p90
      %p92 = pneg %p91
      // Predicated region
      $region21: #{tpu_custom_call.1} parent=5 // pred_check
        _
      $region22: #{tpu_custom_call.1} parent=5 // pred_check_branch
        %94 = sbr.rel (%p91) target = $region24
      $region23: #{tpu_custom_call.1} parent=5 // pred_region
        %s95 = ssub.s32 %s11, 1
        // Predicated region
        $region25: #{tpu_custom_call.1} parent=23 // pred_check
          %p96 = pneg %p32
        $region26: #{tpu_custom_call.1} parent=23 // pred_check_branch
          %98 = sbr.rel (%p96) target = $region28
        $region27: #{tpu_custom_call.1} parent=23 // pred_region
          %100 = dma.done [#allocation3], 128
        $region28: #{tpu_custom_call.1} parent=23 // pred_fallthru
          _
        %p101 = pneg %p32
        %p102 = pneg %p29
        %p103 = pneg %p58
        %p104 = pneg %p55
        %s105 = sand.u32 %s45, 1
        %s106 = scalar_lea.sflag [#allocation4], %s105
        %s107 = sand.u32 %s45, 1
        %s108 = smul.addr %s107, 8
        %s109 = scalar_lea.vmem [#allocation5], %s108
        %v110 = vld [vmem:[#allocation2] sm:$0xff]
        %v111 = vmul.f32 %v110, 2.0
        %112 = vst [vmem:[%s109] sm:$0xff] %v111
        %s113 = sand.u32 %s45, 1
        %s114 = scalar_lea.sflag [#allocation4], %s113
        %s115 = sand.u32 %s45, 1
        %s116 = smul.addr %s115, 8
        %s117 = scalar_lea.vmem [#allocation5], %s116
        // Predicated region
        $region29: #{tpu_custom_call.1} parent=23 // pred_check
          %p118 = pneg %p55
        $region30: #{tpu_custom_call.1} parent=23 // pred_check_branch
          %120 = sbr.rel (%p118) target = $region32
        $region31: #{tpu_custom_call.1} parent=23 // pred_region
          %122 = vsyncadd %s114, 0
          %s123 = smul.addr %s16, 8
          %s124 = scalar_lea.hbm %s1, %s123
          %s126 = sshll.u32 %s117, 4
          %s127 = int_to_ptr.vmem [resolvable:$true] %s126
          %s128 = sshll.u32 %s124, 4
          %s129 = int_to_ptr.hbm [resolvable:$true] %s128
          %131 = dma.vmem_to_hbm [thread:$0]  %s127, 128, %s129, %s114
        $region32: #{tpu_custom_call.1} parent=23 // pred_fallthru
          _
      $region24: #{tpu_custom_call.1} parent=5 // pred_fallthru
        _
      %p132 = scmp.le.s32.totalorder 2, %s11
      // Predicated region
      $region33: #{tpu_custom_call.1} parent=5 // pred_check
        %p133 = pneg %p132
      $region34: #{tpu_custom_call.1} parent=5 // pred_check_branch
        %135 = sbr.rel (%p133) target = $region36
      $region35: #{tpu_custom_call.1} parent=5 // pred_region
        %s136 = ssub.s32 %s11, 2
        // Predicated region
        $region37: #{tpu_custom_call.1} parent=35 // pred_check
          %p137 = pneg %p61
        $region38: #{tpu_custom_call.1} parent=35 // pred_check_branch
          %139 = sbr.rel (%p137) target = $region40
        $region39: #{tpu_custom_call.1} parent=35 // pred_region
          %s140 = sand.u32 %s46, 1
          %s141 = scalar_lea.sflag [#allocation4], %s140
          %s142 = sand.u32 %s46, 1
          %s143 = smul.addr %s142, 8
          %s144 = scalar_lea.vmem [#allocation5], %s143
          %146 = dma.done %s141, 128
        $region40: #{tpu_custom_call.1} parent=35 // pred_fallthru
          _
      $region36: #{tpu_custom_call.1} parent=5 // pred_fallthru
        _
    $region6: #{tpu_custom_call.1} parent=1 // loop_footer
      %s15 = sadd.s32 1, %s11
    $region7: #{tpu_custom_call.1} parent=1 // loop_footer_branch
      %10 = sbr.rel target = $region3
    $region8: #{tpu_custom_call.1} parent=1 // loop_exit
      _
    %147 = vsyncpa [#allocation3], 1
    %s148 = scalar_lea.sflag [#allocation3], 1
    %149 = vsyncpa %s148, 1
    %150 = vsyncpa [#allocation4], 1
    %s151 = scalar_lea.sflag [#allocation4], 1
    %152 = vsyncpa %s151, 1

// kernel: tpu_custom_call.1
$region0: #{tpu_custom_call.1}
  #allocation0 [shape = 'u32[]', space=smem, size = 0x4, offset = 0x4, fixed_abs, tag = 'smem constant byte address 0x4 - core index']
  #allocation1 [shape = 'u32[72,128]{1,0:T(1,128)}', space=vmem, size = 0x9000, scoped, tag = 'internal scratch']
  %s0 = inlined_call_operand.vmem [shape: bf16[512,64], index: 0, kind: input, shape index: {}]
  %s1 = inlined_call_operand.vmem [shape: bf16[64,64], index: 1, kind: input, shape index: {}]
  %s2 = inlined_call_operand.vmem [shape: f32[1,64], index: 2, kind: input, shape index: {}]
  %s3 = inlined_call_operand.vmem [shape: f32[1,64], index: 3, kind: input, shape index: {}]
  %s4 = inlined_call_operand.vmem [shape: bf16[512,64], index: 4, kind: output, shape index: {}]
  %s5 = sld [smem:[#allocation0]]
  $region26: #{tpu_custom_call.1} parent=0
    _
  %s7 = ssub.s32 1, %s5
  %s8 = scalar_select 0, %s7, %s5
  // Predicated region
  $region2: #{tpu_custom_call.1} parent=0 // pred_check
    _
  $region3: #{tpu_custom_call.1} parent=0 // pred_check_branch
    %10 = sbr.rel (0) target = $region5
  $region4: #{tpu_custom_call.1} parent=0 // pred_region
    _
  $region5: #{tpu_custom_call.1} parent=0 // pred_fallthru
    _
  // Predicated region
  $region6: #{tpu_custom_call.1} parent=0 // pred_check
    _
  $region7: #{tpu_custom_call.1} parent=0 // pred_check_branch
    %12 = sbr.rel (0) target = $region9
  $region8: #{tpu_custom_call.1} parent=0 // pred_region
    _
  $region9: #{tpu_custom_call.1} parent=0 // pred_fallthru
    _
  // Predicated region
  $region10: #{tpu_custom_call.1} parent=0 // pred_check
    _
  $region11: #{tpu_custom_call.1} parent=0 // pred_check_branch
    %14 = sbr.rel (0) target = $region13
  $region12: #{tpu_custom_call.1} parent=0 // pred_region
    _
  $region13: #{tpu_custom_call.1} parent=0 // pred_fallthru
    _
  // Predicated region
  $region14: #{tpu_custom_call.1} parent=0 // pred_check
    _
  $region15: #{tpu_custom_call.1} parent=0 // pred_check_branch
    %16 = sbr.rel (0) target = $region17
  $region16: #{tpu_custom_call.1} parent=0 // pred_region
    _
  $region17: #{tpu_custom_call.1} parent=0 // pred_fallthru
    _
  %v18 = vld [vmem:[%s0] sm:$0xf]
  %v19 = vld [vmem:[%s0 + $0x4] sm:$0xf]
  %v20 = vld [vmem:[%s0 + $0x8] sm:$0xf]
  %v21 = vld [vmem:[%s0 + $0xc] sm:$0xf]
  %v22 = vld [vmem:[%s0 + $0x10] sm:$0xf]
  %v23 = vld [vmem:[%s0 + $0x14] sm:$0xf]
  %v24 = vld [vmem:[%s0 + $0x18] sm:$0xf]
  %v25 = vld [vmem:[%s0 + $0x1c] sm:$0xf]
  %v26 = vld [vmem:[%s0 + $0x20] sm:$0xf]
  %v27 = vld [vmem:[%s0 + $0x24] sm:$0xf]
  %v28 = vld [vmem:[%s0 + $0x28] sm:$0xf]
  %v29 = vld [vmem:[%s0 + $0x2c] sm:$0xf]
  %v30 = vld [vmem:[%s0 + $0x30] sm:$0xf]
  %v31 = vld [vmem:[%s0 + $0x34] sm:$0xf]
  %v32 = vld [vmem:[%s0 + $0x38] sm:$0xf]
  %v33 = vld [vmem:[%s0 + $0x3c] sm:$0xf]
  %v34 = vld [vmem:[%s0 + $0x40] sm:$0xf]
  %v35 = vld [vmem:[%s0 + $0x44] sm:$0xf]
  %v36 = vld [vmem:[%s0 + $0x48] sm:$0xf]
  %v37 = vld [vmem:[%s0 + $0x4c] sm:$0xf]
  %v38 = vld [vmem:[%s0 + $0x50] sm:$0xf]
  %v39 = vld [vmem:[%s0 + $0x54] sm:$0xf]
  %v40 = vld [vmem:[%s0 + $0x58] sm:$0xf]
  %v41 = vld [vmem:[%s0 + $0x5c] sm:$0xf]
  %v42 = vld [vmem:[%s0 + $0x60] sm:$0xf]
  %v43 = vld [vmem:[%s0 + $0x64] sm:$0xf]
  %v44 = vld [vmem:[%s0 + $0x68] sm:$0xf]
  %v45 = vld [vmem:[%s0 + $0x6c] sm:$0xf]
  %v46 = vld [vmem:[%s0 + $0x70] sm:$0xf]
  %v47 = vld [vmem:[%s0 + $0x74] sm:$0xf]
  %v48 = vld [vmem:[%s0 + $0x78] sm:$0xf]
  %v49 = vld [vmem:[%s0 + $0x7c] sm:$0xf]
  %v50 = vld [vmem:[%s0 + $0x80] sm:$0xf]
  %v51 = vld [vmem:[%s0 + $0x84] sm:$0xf]
  %v52 = vld [vmem:[%s0 + $0x88] sm:$0xf]
  %v53 = vld [vmem:[%s0 + $0x8c] sm:$0xf]
  %v54 = vld [vmem:[%s0 + $0x90] sm:$0xf]
  %v55 = vld [vmem:[%s0 + $0x94] sm:$0xf]
  %v56 = vld [vmem:[%s0 + $0x98] sm:$0xf]
  %v57 = vld [vmem:[%s0 + $0x9c] sm:$0xf]
  %v58 = vld [vmem:[%s0 + $0xa0] sm:$0xf]
  %v59 = vld [vmem:[%s0 + $0xa4] sm:$0xf]
  %v60 = vld [vmem:[%s0 + $0xa8] sm:$0xf]
  %v61 = vld [vmem:[%s0 + $0xac] sm:$0xf]
  %v62 = vld [vmem:[%s0 + $0xb0] sm:$0xf]
  %v63 = vld [vmem:[%s0 + $0xb4] sm:$0xf]
  %v64 = vld [vmem:[%s0 + $0xb8] sm:$0xf]
  %v65 = vld [vmem:[%s0 + $0xbc] sm:$0xf]
  %v66 = vld [vmem:[%s0 + $0xc0] sm:$0xf]
  %v67 = vld [vmem:[%s0 + $0xc4] sm:$0xf]
  %v68 = vld [vmem:[%s0 + $0xc8] sm:$0xf]
  %v69 = vld [vmem:[%s0 + $0xcc] sm:$0xf]
  %v70 = vld [vmem:[%s0 + $0xd0] sm:$0xf]
  %v71 = vld [vmem:[%s0 + $0xd4] sm:$0xf]
  %v72 = vld [vmem:[%s0 + $0xd8] sm:$0xf]
  %v73 = vld [vmem:[%s0 + $0xdc] sm:$0xf]
  %v74 = vld [vmem:[%s0 + $0xe0] sm:$0xf]
  %v75 = vld [vmem:[%s0 + $0xe4] sm:$0xf]
  %v76 = vld [vmem:[%s0 + $0xe8] sm:$0xf]
  %v77 = vld [vmem:[%s0 + $0xec] sm:$0xf]
  %v78 = vld [vmem:[%s0 + $0xf0] sm:$0xf]
  %v79 = vld [vmem:[%s0 + $0xf4] sm:$0xf]
  %v80 = vld [vmem:[%s0 + $0xf8] sm:$0xf]
  %v81 = vld [vmem:[%s0 + $0xfc] sm:$0xf]
  %v82 = vld [vmem:[%s1] sm:$0xf]
  %v83 = vld [vmem:[%s1 + $0x4] sm:$0xf]
  %v84 = vld [vmem:[%s1 + $0x8] sm:$0xf]
  %v85 = vld [vmem:[%s1 + $0xc] sm:$0xf]
  %v86 = vld [vmem:[%s1 + $0x10] sm:$0xf]
  %v87 = vld [vmem:[%s1 + $0x14] sm:$0xf]
  %v88 = vld [vmem:[%s1 + $0x18] sm:$0xf]
  %v89 = vld [vmem:[%s1 + $0x1c] sm:$0xf]
  %v154 = vunpack.c.l.b16 %v18
  %v155 = vunpack.c.l.b16 %v19
  %v156 = vunpack.c.l.b16 %v20
  %v157 = vunpack.c.l.b16 %v21
  %v158 = vunpack.c.l.b16 %v22
  %v159 = vunpack.c.l.b16 %v23
  %v160 = vunpack.c.l.b16 %v24
  %v161 = vunpack.c.l.b16 %v25
  %v162 = vunpack.c.l.b16 %v26
  %v163 = vunpack.c.l.b16 %v27
  %v164 = vunpack.c.l.b16 %v28
  %v165 = vunpack.c.l.b16 %v29
  %v166 = vunpack.c.l.b16 %v30
  %v167 = vunpack.c.l.b16 %v31
  %v168 = vunpack.c.l.b16 %v32
  %v169 = vunpack.c.l.b16 %v33
  %v170 = vunpack.c.l.b16 %v34
  %v171 = vunpack.c.l.b16 %v35
  %v172 = vunpack.c.l.b16 %v36
  %v173 = vunpack.c.l.b16 %v37
  %v174 = vunpack.c.l.b16 %v38
  %v175 = vunpack.c.l.b16 %v39
  %v176 = vunpack.c.l.b16 %v40
  %v177 = vunpack.c.l.b16 %v41
  %v178 = vunpack.c.l.b16 %v42
  %v179 = vunpack.c.l.b16 %v43
  %v180 = vunpack.c.l.b16 %v44
  %v181 = vunpack.c.l.b16 %v45
  %v182 = vunpack.c.l.b16 %v46
  %v183 = vunpack.c.l.b16 %v47
  %v184 = vunpack.c.l.b16 %v48
  %v185 = vunpack.c.l.b16 %v49
  %v186 = vunpack.c.l.b16 %v50
  %v187 = vunpack.c.l.b16 %v51
  %v188 = vunpack.c.l.b16 %v52
  %v189 = vunpack.c.l.b16 %v53
  %v190 = vunpack.c.l.b16 %v54
  %v191 = vunpack.c.l.b16 %v55
  %v192 = vunpack.c.l.b16 %v56
  %v193 = vunpack.c.l.b16 %v57
  %v194 = vunpack.c.l.b16 %v58
  %v195 = vunpack.c.l.b16 %v59
  %v196 = vunpack.c.l.b16 %v60
  %v197 = vunpack.c.l.b16 %v61
  %v198 = vunpack.c.l.b16 %v62
  %v199 = vunpack.c.l.b16 %v63
  %v200 = vunpack.c.l.b16 %v64
  %v201 = vunpack.c.l.b16 %v65
  %v202 = vunpack.c.l.b16 %v66
  %v203 = vunpack.c.l.b16 %v67
  %v204 = vunpack.c.l.b16 %v68
  %v205 = vunpack.c.l.b16 %v69
  %v206 = vunpack.c.l.b16 %v70
  %v207 = vunpack.c.l.b16 %v71
  %v208 = vunpack.c.l.b16 %v72
  %v209 = vunpack.c.l.b16 %v73
  %v210 = vunpack.c.l.b16 %v74
  %v211 = vunpack.c.l.b16 %v75
  %v212 = vunpack.c.l.b16 %v76
  %v213 = vunpack.c.l.b16 %v77
  %v214 = vunpack.c.l.b16 %v78
  %v215 = vunpack.c.l.b16 %v79
  %v216 = vunpack.c.l.b16 %v80
  %v217 = vunpack.c.l.b16 %v81
  %v218 = vpack.c.b16 %v155, %v154
  %v219 = vpack.c.b16 %v157, %v156
  %v220 = vpack.c.b16 %v159, %v158
  %v221 = vpack.c.b16 %v161, %v160
  %v222 = vpack.c.b16 %v163, %v162
  %v223 = vpack.c.b16 %v165, %v164
  %v224 = vpack.c.b16 %v167, %v166
  %v225 = vpack.c.b16 %v169, %v168
  %v226 = vpack.c.b16 %v171, %v170
  %v227 = vpack.c.b16 %v173, %v172
  %v228 = vpack.c.b16 %v175, %v174
  %v229 = vpack.c.b16 %v177, %v176
  %v230 = vpack.c.b16 %v179, %v178
  %v231 = vpack.c.b16 %v181, %v180
  %v232 = vpack.c.b16 %v183, %v182
  %v233 = vpack.c.b16 %v185, %v184
  %v234 = vpack.c.b16 %v187, %v186
  %v235 = vpack.c.b16 %v189, %v188
  %v236 = vpack.c.b16 %v191, %v190
  %v237 = vpack.c.b16 %v193, %v192
  %v238 = vpack.c.b16 %v195, %v194
  %v239 = vpack.c.b16 %v197, %v196
  %v240 = vpack.c.b16 %v199, %v198
  %v241 = vpack.c.b16 %v201, %v200
  %v242 = vpack.c.b16 %v203, %v202
  %v243 = vpack.c.b16 %v205, %v204
  %v244 = vpack.c.b16 %v207, %v206
  %v245 = vpack.c.b16 %v209, %v208
  %v246 = vpack.c.b16 %v211, %v210
  %v247 = vpack.c.b16 %v213, %v212
  %v248 = vpack.c.b16 %v215, %v214
  %v249 = vpack.c.b16 %v217, %v216
  %v258 = vunpack.c.l.b16 %v82
  %v259 = vunpack.c.l.b16 %v83
  %v260 = vunpack.c.l.b16 %v84
  %v261 = vunpack.c.l.b16 %v85
  %v262 = vunpack.c.l.b16 %v86
  %v263 = vunpack.c.l.b16 %v87
  %v264 = vunpack.c.l.b16 %v88
  %v265 = vunpack.c.l.b16 %v89
  %v266 = vpack.c.b16 %v259, %v258
  %v267 = vpack.c.b16 %v261, %v260
  %v268 = vpack.c.b16 %v263, %v262
  %v269 = vpack.c.b16 %v265, %v264
  %vm274 = vcmask 523264
  %v276 = vsel %vm274, %v218, 0
  %v279 = vsel %vm274, %v219, 0
  %v282 = vsel %vm274, %v220, 0
  %v285 = vsel %vm274, %v221, 0
  %v288 = vsel %vm274, %v222, 0
  %v291 = vsel %vm274, %v223, 0
  %v294 = vsel %vm274, %v224, 0
  %v297 = vsel %vm274, %v225, 0
  %v300 = vsel %vm274, %v226, 0
  %v303 = vsel %vm274, %v227, 0
  %v306 = vsel %vm274, %v228, 0
  %v309 = vsel %vm274, %v229, 0
  %v312 = vsel %vm274, %v230, 0
  %v315 = vsel %vm274, %v231, 0
  %v318 = vsel %vm274, %v232, 0
  %v321 = vsel %vm274, %v233, 0
  %v324 = vsel %vm274, %v234, 0
  %v327 = vsel %vm274, %v235, 0
  %v330 = vsel %vm274, %v236, 0
  %v333 = vsel %vm274, %v237, 0
  %v336 = vsel %vm274, %v238, 0
  %v339 = vsel %vm274, %v239, 0
  %v342 = vsel %vm274, %v240, 0
  %v345 = vsel %vm274, %v241, 0
  %v348 = vsel %vm274, %v242, 0
  %v351 = vsel %vm274, %v243, 0
  %v354 = vsel %vm274, %v244, 0
  %v357 = vsel %vm274, %v245, 0
  %v360 = vsel %vm274, %v246, 0
  %v363 = vsel %vm274, %v247, 0
  %v366 = vsel %vm274, %v248, 0
  %v369 = vsel %vm274, %v249, 0
  %371 = vmatpush.bf16.msra.mxu0 0
  %372 = vmatpush.bf16.msra.mxu0 0
  %373 = vmatpush.bf16.msra.mxu0 0
  %374 = vmatpush.bf16.msra.mxu0 0
  %375 = vmatpush.bf16.msra.mxu0 %v269
  %376 = vmatpush.bf16.msra.mxu0 %v268
  %377 = vmatpush.bf16.msra.mxu0 %v267
  %378 = vmatpush.bf16.msra.mxu0 %v266
  %379 = vmatmul.bf16.gmra.mxu0 %v276
  %v380 = vpop.f32.mrf.mxu0
  %v381 = vadd.f32 0.0, %v380
  %v382 = vpop.f32.mrf.mxu0
  %v383 = vadd.f32 0.0, %v382
  %384 = vmatmul.bf16.gmra.mxu0 %v279
  %v385 = vpop.f32.mrf.mxu0
  %v386 = vadd.f32 0.0, %v385
  %v387 = vpop.f32.mrf.mxu0
  %v388 = vadd.f32 0.0, %v387
  %389 = vmatmul.bf16.gmra.mxu0 %v282
  %v390 = vpop.f32.mrf.mxu0
  %v391 = vadd.f32 0.0, %v390
  %v392 = vpop.f32.mrf.mxu0
  %v393 = vadd.f32 0.0, %v392
  %394 = vmatmul.bf16.gmra.mxu0 %v285
  %v395 = vpop.f32.mrf.mxu0
  %v396 = vadd.f32 0.0, %v395
  %v397 = vpop.f32.mrf.mxu0
  %v398 = vadd.f32 0.0, %v397
  %399 = vmatmul.bf16.gmra.mxu0 %v288
  %v400 = vpop.f32.mrf.mxu0
  %v401 = vadd.f32 0.0, %v400
  %v402 = vpop.f32.mrf.mxu0
  %v403 = vadd.f32 0.0, %v402
  %404 = vmatmul.bf16.gmra.mxu0 %v291
  %v405 = vpop.f32.mrf.mxu0
  %v406 = vadd.f32 0.0, %v405
  %v407 = vpop.f32.mrf.mxu0
  %v408 = vadd.f32 0.0, %v407
  %409 = vmatmul.bf16.gmra.mxu0 %v294
  %v410 = vpop.f32.mrf.mxu0
  %v411 = vadd.f32 0.0, %v410
  %v412 = vpop.f32.mrf.mxu0
  %v413 = vadd.f32 0.0, %v412
  %414 = vmatmul.bf16.gmra.mxu0 %v297
  %v415 = vpop.f32.mrf.mxu0
  %v416 = vadd.f32 0.0, %v415
  %v417 = vpop.f32.mrf.mxu0
  %v418 = vadd.f32 0.0, %v417
  %419 = vmatmul.bf16.gmra.mxu0 %v300
  %v420 = vpop.f32.mrf.mxu0
  %v421 = vadd.f32 0.0, %v420
  %v422 = vpop.f32.mrf.mxu0
  %v423 = vadd.f32 0.0, %v422
  %424 = vmatmul.bf16.gmra.mxu0 %v303
  %v425 = vpop.f32.mrf.mxu0
  %v426 = vadd.f32 0.0, %v425
  %v427 = vpop.f32.mrf.mxu0
  %v428 = vadd.f32 0.0, %v427
  %429 = vmatmul.bf16.gmra.mxu0 %v306
  %v430 = vpop.f32.mrf.mxu0
  %v431 = vadd.f32 0.0, %v430
  %v432 = vpop.f32.mrf.mxu0
  %v433 = vadd.f32 0.0, %v432
  %434 = vmatmul.bf16.gmra.mxu0 %v309
  %v435 = vpop.f32.mrf.mxu0
  %v436 = vadd.f32 0.0, %v435
  %v437 = vpop.f32.mrf.mxu0
  %v438 = vadd.f32 0.0, %v437
  %439 = vmatmul.bf16.gmra.mxu0 %v312
  %v440 = vpop.f32.mrf.mxu0
  %v441 = vadd.f32 0.0, %v440
  %v442 = vpop.f32.mrf.mxu0
  %v443 = vadd.f32 0.0, %v442
  %444 = vmatmul.bf16.gmra.mxu0 %v315
  %v445 = vpop.f32.mrf.mxu0
  %v446 = vadd.f32 0.0, %v445
  %v447 = vpop.f32.mrf.mxu0
  %v448 = vadd.f32 0.0, %v447
  %449 = vmatmul.bf16.gmra.mxu0 %v318
  %v450 = vpop.f32.mrf.mxu0
  %v451 = vadd.f32 0.0, %v450
  %v452 = vpop.f32.mrf.mxu0
  %v453 = vadd.f32 0.0, %v452
  %454 = vmatmul.bf16.gmra.mxu0 %v321
  %v455 = vpop.f32.mrf.mxu0
  %v456 = vadd.f32 0.0, %v455
  %v457 = vpop.f32.mrf.mxu0
  %v458 = vadd.f32 0.0, %v457
  %459 = vmatmul.bf16.gmra.mxu0 %v324
  %v460 = vpop.f32.mrf.mxu0
  %v461 = vadd.f32 0.0, %v460
  %v462 = vpop.f32.mrf.mxu0
  %v463 = vadd.f32 0.0, %v462
  %464 = vmatmul.bf16.gmra.mxu0 %v327
  %v465 = vpop.f32.mrf.mxu0
  %v466 = vadd.f32 0.0, %v465
  %v467 = vpop.f32.mrf.mxu0
  %v468 = vadd.f32 0.0, %v467
  %469 = vmatmul.bf16.gmra.mxu0 %v330
  %v470 = vpop.f32.mrf.mxu0
  %v471 = vadd.f32 0.0, %v470
  %v472 = vpop.f32.mrf.mxu0
  %v473 = vadd.f32 0.0, %v472
  %474 = vmatmul.bf16.gmra.mxu0 %v333
  %v475 = vpop.f32.mrf.mxu0
  %v476 = vadd.f32 0.0, %v475
  %v477 = vpop.f32.mrf.mxu0
  %v478 = vadd.f32 0.0, %v477
  %479 = vmatmul.bf16.gmra.mxu0 %v336
  %v480 = vpop.f32.mrf.mxu0
  %v481 = vadd.f32 0.0, %v480
  %v482 = vpop.f32.mrf.mxu0
  %v483 = vadd.f32 0.0, %v482
  %484 = vmatmul.bf16.gmra.mxu0 %v339
  %v485 = vpop.f32.mrf.mxu0
  %v486 = vadd.f32 0.0, %v485
  %v487 = vpop.f32.mrf.mxu0
  %v488 = vadd.f32 0.0, %v487
  %489 = vmatmul.bf16.gmra.mxu0 %v342
  %v490 = vpop.f32.mrf.mxu0
  %v491 = vadd.f32 0.0, %v490
  %v492 = vpop.f32.mrf.mxu0
  %v493 = vadd.f32 0.0, %v492
  %494 = vmatmul.bf16.gmra.mxu0 %v345
  %v495 = vpop.f32.mrf.mxu0
  %v496 = vadd.f32 0.0, %v495
  %v497 = vpop.f32.mrf.mxu0
  %v498 = vadd.f32 0.0, %v497
  %499 = vmatmul.bf16.gmra.mxu0 %v348
  %v500 = vpop.f32.mrf.mxu0
  %v501 = vadd.f32 0.0, %v500
  %v502 = vpop.f32.mrf.mxu0
  %v503 = vadd.f32 0.0, %v502
  %504 = vmatmul.bf16.gmra.mxu0 %v351
  %v505 = vpop.f32.mrf.mxu0
  %v506 = vadd.f32 0.0, %v505
  %v507 = vpop.f32.mrf.mxu0
  %v508 = vadd.f32 0.0, %v507
  %509 = vmatmul.bf16.gmra.mxu0 %v354
  %v510 = vpop.f32.mrf.mxu0
  %v511 = vadd.f32 0.0, %v510
  %v512 = vpop.f32.mrf.mxu0
  %v513 = vadd.f32 0.0, %v512
  %514 = vmatmul.bf16.gmra.mxu0 %v357
  %v515 = vpop.f32.mrf.mxu0
  %v516 = vadd.f32 0.0, %v515
  %v517 = vpop.f32.mrf.mxu0
  %v518 = vadd.f32 0.0, %v517
  %519 = vmatmul.bf16.gmra.mxu0 %v360
  %v520 = vpop.f32.mrf.mxu0
  %v521 = vadd.f32 0.0, %v520
  %v522 = vpop.f32.mrf.mxu0
  %v523 = vadd.f32 0.0, %v522
  %524 = vmatmul.bf16.gmra.mxu0 %v363
  %v525 = vpop.f32.mrf.mxu0
  %v526 = vadd.f32 0.0, %v525
  %v527 = vpop.f32.mrf.mxu0
  %v528 = vadd.f32 0.0, %v527
  %529 = vmatmul.bf16.gmra.mxu0 %v366
  %v530 = vpop.f32.mrf.mxu0
  %v531 = vadd.f32 0.0, %v530
  %v532 = vpop.f32.mrf.mxu0
  %v533 = vadd.f32 0.0, %v532
  %534 = vmatmul.bf16.gmra.mxu0 %v369
  %v535 = vpop.f32.mrf.mxu0
  %v536 = vadd.f32 0.0, %v535
  %v537 = vpop.f32.mrf.mxu0
  %v538 = vadd.f32 0.0, %v537
  %539 = vdwg.mxu0
  %v540 = vld [vmem:[%s2] sm:$0x1]
  %v542 = vperm.slane %v540, 0
  %v544 = vmul.f32 %v381, %v542
  %v545 = vmul.f32 %v383, %v542
  %v546 = vmul.f32 %v386, %v542
  %v547 = vmul.f32 %v388, %v542
  %v548 = vmul.f32 %v391, %v542
  %v549 = vmul.f32 %v393, %v542
  %v550 = vmul.f32 %v396, %v542
  %v551 = vmul.f32 %v398, %v542
  %v552 = vmul.f32 %v401, %v542
  %v553 = vmul.f32 %v403, %v542
  %v554 = vmul.f32 %v406, %v542
  %v555 = vmul.f32 %v408, %v542
  %v556 = vmul.f32 %v411, %v542
  %v557 = vmul.f32 %v413, %v542
  %v558 = vmul.f32 %v416, %v542
  %v559 = vmul.f32 %v418, %v542
  %v560 = vmul.f32 %v421, %v542
  %v561 = vmul.f32 %v423, %v542
  %v562 = vmul.f32 %v426, %v542
  %v563 = vmul.f32 %v428, %v542
  %v564 = vmul.f32 %v431, %v542
  %v565 = vmul.f32 %v433, %v542
  %v566 = vmul.f32 %v436, %v542
  %v567 = vmul.f32 %v438, %v542
  %v568 = vmul.f32 %v441, %v542
  %v569 = vmul.f32 %v443, %v542
  %v570 = vmul.f32 %v446, %v542
  %v571 = vmul.f32 %v448, %v542
  %v572 = vmul.f32 %v451, %v542
  %v573 = vmul.f32 %v453, %v542
  %v574 = vmul.f32 %v456, %v542
  %v575 = vmul.f32 %v458, %v542
  %v576 = vmul.f32 %v461, %v542
  %v577 = vmul.f32 %v463, %v542
  %v578 = vmul.f32 %v466, %v542
  %v579 = vmul.f32 %v468, %v542
  %v580 = vmul.f32 %v471, %v542
  %v581 = vmul.f32 %v473, %v542
  %v582 = vmul.f32 %v476, %v542
  %v583 = vmul.f32 %v478, %v542
  %v584 = vmul.f32 %v481, %v542
  %v585 = vmul.f32 %v483, %v542
  %v586 = vmul.f32 %v486, %v542
  %v587 = vmul.f32 %v488, %v542
  %v588 = vmul.f32 %v491, %v542
  %v589 = vmul.f32 %v493, %v542
  %v590 = vmul.f32 %v496, %v542
  %v591 = vmul.f32 %v498, %v542
  %v592 = vmul.f32 %v501, %v542
  %v593 = vmul.f32 %v503, %v542
  %v594 = vmul.f32 %v506, %v542
  %v595 = vmul.f32 %v508, %v542
  %v596 = vmul.f32 %v511, %v542
  %v597 = vmul.f32 %v513, %v542
  %v598 = vmul.f32 %v516, %v542
  %v599 = vmul.f32 %v518, %v542
  %v600 = vmul.f32 %v521, %v542
  %v601 = vmul.f32 %v523, %v542
  %v602 = vmul.f32 %v526, %v542
  %v603 = vmul.f32 %v528, %v542
  %v604 = vmul.f32 %v531, %v542
  %v605 = vmul.f32 %v533, %v542
  %v606 = vmul.f32 %v536, %v542
  %v607 = vmul.f32 %v538, %v542
  %v608 = vld [vmem:[%s3] sm:$0x1]
  %v610 = vperm.slane %v608, 0
  %v612 = vadd.f32 %v544, %v610
  %v613 = vadd.f32 %v545, %v610
  %v614 = vadd.f32 %v546, %v610
  %v615 = vadd.f32 %v547, %v610
  %v616 = vadd.f32 %v548, %v610
  %v617 = vadd.f32 %v549, %v610
  %v618 = vadd.f32 %v550, %v610
  %v619 = vadd.f32 %v551, %v610
  %v620 = vadd.f32 %v552, %v610
  %v621 = vadd.f32 %v553, %v610
  %v622 = vadd.f32 %v554, %v610
  %v623 = vadd.f32 %v555, %v610
  %v624 = vadd.f32 %v556, %v610
  %v625 = vadd.f32 %v557, %v610
  %v626 = vadd.f32 %v558, %v610
  %v627 = vadd.f32 %v559, %v610
  %v628 = vadd.f32 %v560, %v610
  %v629 = vadd.f32 %v561, %v610
  %v630 = vadd.f32 %v562, %v610
  %v631 = vadd.f32 %v563, %v610
  %v632 = vadd.f32 %v564, %v610
  %v633 = vadd.f32 %v565, %v610
  %v634 = vadd.f32 %v566, %v610
  %v635 = vadd.f32 %v567, %v610
  %v636 = vadd.f32 %v568, %v610
  %v637 = vadd.f32 %v569, %v610
  %v638 = vadd.f32 %v570, %v610
  %v639 = vadd.f32 %v571, %v610
  %v640 = vadd.f32 %v572, %v610
  %v641 = vadd.f32 %v573, %v610
  %v642 = vadd.f32 %v574, %v610
  %v643 = vadd.f32 %v575, %v610
  %v644 = vadd.f32 %v576, %v610
  %v645 = vadd.f32 %v577, %v610
  %v646 = vadd.f32 %v578, %v610
  %v647 = vadd.f32 %v579, %v610
  %v648 = vadd.f32 %v580, %v610
  %v649 = vadd.f32 %v581, %v610
  %v650 = vadd.f32 %v582, %v610
  %v651 = vadd.f32 %v583, %v610
  %v652 = vadd.f32 %v584, %v610
  %v653 = vadd.f32 %v585, %v610
  %v654 = vadd.f32 %v586, %v610
  %v655 = vadd.f32 %v587, %v610
  %v656 = vadd.f32 %v588, %v610
  %v657 = vadd.f32 %v589, %v610
  %v658 = vadd.f32 %v590, %v610
  %v659 = vadd.f32 %v591, %v610
  %v660 = vadd.f32 %v592, %v610
  %v661 = vadd.f32 %v593, %v610
  %v662 = vadd.f32 %v594, %v610
  %v663 = vadd.f32 %v595, %v610
  %v664 = vadd.f32 %v596, %v610
  %v665 = vadd.f32 %v597, %v610
  %v666 = vadd.f32 %v598, %v610
  %v667 = vadd.f32 %v599, %v610
  %v668 = vadd.f32 %v600, %v610
  %v669 = vadd.f32 %v601, %v610
  %v670 = vadd.f32 %v602, %v610
  %v671 = vadd.f32 %v603, %v610
  %v672 = vadd.f32 %v604, %v610
  %v673 = vadd.f32 %v605, %v610
  %v674 = vadd.f32 %v606, %v610
  %v675 = vadd.f32 %v607, %v610
  %v676 = vmax.f32 %v612, 0.0
  %v677 = vmax.f32 %v613, 0.0
  %v678 = vmax.f32 %v614, 0.0
  %v679 = vmax.f32 %v615, 0.0
  %v680 = vmax.f32 %v616, 0.0
  %v681 = vmax.f32 %v617, 0.0
  %v682 = vmax.f32 %v618, 0.0
  %v683 = vmax.f32 %v619, 0.0
  %v684 = vmax.f32 %v620, 0.0
  %v685 = vmax.f32 %v621, 0.0
  %v686 = vmax.f32 %v622, 0.0
  %v687 = vmax.f32 %v623, 0.0
  %v688 = vmax.f32 %v624, 0.0
  %v689 = vmax.f32 %v625, 0.0
  %v690 = vmax.f32 %v626, 0.0
  %v691 = vmax.f32 %v627, 0.0
  %v692 = vmax.f32 %v628, 0.0
  %v693 = vmax.f32 %v629, 0.0
  %v694 = vmax.f32 %v630, 0.0
  %v695 = vmax.f32 %v631, 0.0
  %v696 = vmax.f32 %v632, 0.0
  %v697 = vmax.f32 %v633, 0.0
  %v698 = vmax.f32 %v634, 0.0
  %v699 = vmax.f32 %v635, 0.0
  %v700 = vmax.f32 %v636, 0.0
  %v701 = vmax.f32 %v637, 0.0
  %v702 = vmax.f32 %v638, 0.0
  %v703 = vmax.f32 %v639, 0.0
  %v704 = vmax.f32 %v640, 0.0
  %v705 = vmax.f32 %v641, 0.0
  %v706 = vmax.f32 %v642, 0.0
  %v707 = vmax.f32 %v643, 0.0
  %v708 = vmax.f32 %v644, 0.0
  %v709 = vmax.f32 %v645, 0.0
  %v710 = vmax.f32 %v646, 0.0
  %v711 = vmax.f32 %v647, 0.0
  %v712 = vmax.f32 %v648, 0.0
  %v713 = vmax.f32 %v649, 0.0
  %v714 = vmax.f32 %v650, 0.0
  %v715 = vmax.f32 %v651, 0.0
  %v716 = vmax.f32 %v652, 0.0
  %v717 = vmax.f32 %v653, 0.0
  %v718 = vmax.f32 %v654, 0.0
  %v719 = vmax.f32 %v655, 0.0
  %v720 = vmax.f32 %v656, 0.0
  %v721 = vmax.f32 %v657, 0.0
  %v722 = vmax.f32 %v658, 0.0
  %v723 = vmax.f32 %v659, 0.0
  %v724 = vmax.f32 %v660, 0.0
  %v725 = vmax.f32 %v661, 0.0
  %v726 = vmax.f32 %v662, 0.0
  %v727 = vmax.f32 %v663, 0.0
  %v728 = vmax.f32 %v664, 0.0
  %v729 = vmax.f32 %v665, 0.0
  %v730 = vmax.f32 %v666, 0.0
  %v731 = vmax.f32 %v667, 0.0
  %v732 = vmax.f32 %v668, 0.0
  %v733 = vmax.f32 %v669, 0.0
  %v734 = vmax.f32 %v670, 0.0
  %v735 = vmax.f32 %v671, 0.0
  %v736 = vmax.f32 %v672, 0.0
  %v737 = vmax.f32 %v673, 0.0
  %v738 = vmax.f32 %v674, 0.0
  %v739 = vmax.f32 %v675, 0.0
  %v740 = vpack.c.bf16 %v676, %v676
  %v741 = vpack.c.bf16 %v677, %v677
  %v742 = vpack.c.bf16 %v678, %v678
  %v743 = vpack.c.bf16 %v679, %v679
  %v744 = vpack.c.bf16 %v680, %v680
  %v745 = vpack.c.bf16 %v681, %v681
  %v746 = vpack.c.bf16 %v682, %v682
  %v747 = vpack.c.bf16 %v683, %v683
  %v748 = vpack.c.bf16 %v684, %v684
  %v749 = vpack.c.bf16 %v685, %v685
  %v750 = vpack.c.bf16 %v686, %v686
  %v751 = vpack.c.bf16 %v687, %v687
  %v752 = vpack.c.bf16 %v688, %v688
  %v753 = vpack.c.bf16 %v689, %v689
  %v754 = vpack.c.bf16 %v690, %v690
  %v755 = vpack.c.bf16 %v691, %v691
  %v756 = vpack.c.bf16 %v692, %v692
  %v757 = vpack.c.bf16 %v693, %v693
  %v758 = vpack.c.bf16 %v694, %v694
  %v759 = vpack.c.bf16 %v695, %v695
  %v760 = vpack.c.bf16 %v696, %v696
  %v761 = vpack.c.bf16 %v697, %v697
  %v762 = vpack.c.bf16 %v698, %v698
  %v763 = vpack.c.bf16 %v699, %v699
  %v764 = vpack.c.bf16 %v700, %v700
  %v765 = vpack.c.bf16 %v701, %v701
  %v766 = vpack.c.bf16 %v702, %v702
  %v767 = vpack.c.bf16 %v703, %v703
  %v768 = vpack.c.bf16 %v704, %v704
  %v769 = vpack.c.bf16 %v705, %v705
  %v770 = vpack.c.bf16 %v706, %v706
  %v771 = vpack.c.bf16 %v707, %v707
  %v772 = vpack.c.bf16 %v708, %v708
  %v773 = vpack.c.bf16 %v709, %v709
  %v774 = vpack.c.bf16 %v710, %v710
  %v775 = vpack.c.bf16 %v711, %v711
  %v776 = vpack.c.bf16 %v712, %v712
  %v777 = vpack.c.bf16 %v713, %v713
  %v778 = vpack.c.bf16 %v714, %v714
  %v779 = vpack.c.bf16 %v715, %v715
  %v780 = vpack.c.bf16 %v716, %v716
  %v781 = vpack.c.bf16 %v717, %v717
  %v782 = vpack.c.bf16 %v718, %v718
  %v783 = vpack.c.bf16 %v719, %v719
  %v784 = vpack.c.bf16 %v720, %v720
  %v785 = vpack.c.bf16 %v721, %v721
  %v786 = vpack.c.bf16 %v722, %v722
  %v787 = vpack.c.bf16 %v723, %v723
  %v788 = vpack.c.bf16 %v724, %v724
  %v789 = vpack.c.bf16 %v725, %v725
  %v790 = vpack.c.bf16 %v726, %v726
  %v791 = vpack.c.bf16 %v727, %v727
  %v792 = vpack.c.bf16 %v728, %v728
  %v793 = vpack.c.bf16 %v729, %v729
  %v794 = vpack.c.bf16 %v730, %v730
  %v795 = vpack.c.bf16 %v731, %v731
  %v796 = vpack.c.bf16 %v732, %v732
  %v797 = vpack.c.bf16 %v733, %v733
  %v798 = vpack.c.bf16 %v734, %v734
  %v799 = vpack.c.bf16 %v735, %v735
  %v800 = vpack.c.bf16 %v736, %v736
  %v801 = vpack.c.bf16 %v737, %v737
  %v802 = vpack.c.bf16 %v738, %v738
  %v803 = vpack.c.bf16 %v739, %v739
  %vm804 = vcmask 519168
  %805 = vst.msk [vmem:[%s4] sm:$0xf] %vm804, %v740
  %806 = vst.msk [vmem:[%s4 + $0x4] sm:$0xf] %vm804, %v741
  %807 = vst.msk [vmem:[%s4 + $0x8] sm:$0xf] %vm804, %v742
  %808 = vst.msk [vmem:[%s4 + $0xc] sm:$0xf] %vm804, %v743
  %809 = vst.msk [vmem:[%s4 + $0x10] sm:$0xf] %vm804, %v744
  %810 = vst.msk [vmem:[%s4 + $0x14] sm:$0xf] %vm804, %v745
  %811 = vst.msk [vmem:[%s4 + $0x18] sm:$0xf] %vm804, %v746
  %812 = vst.msk [vmem:[%s4 + $0x1c] sm:$0xf] %vm804, %v747
  %813 = vst.msk [vmem:[%s4 + $0x20] sm:$0xf] %vm804, %v748
  %814 = vst.msk [vmem:[%s4 + $0x24] sm:$0xf] %vm804, %v749
  %815 = vst.msk [vmem:[%s4 + $0x28] sm:$0xf] %vm804, %v750
  %816 = vst.msk [vmem:[%s4 + $0x2c] sm:$0xf] %vm804, %v751
  %817 = vst.msk [vmem:[%s4 + $0x30] sm:$0xf] %vm804, %v752
  %818 = vst.msk [vmem:[%s4 + $0x34] sm:$0xf] %vm804, %v753
  %819 = vst.msk [vmem:[%s4 + $0x38] sm:$0xf] %vm804, %v754
  %820 = vst.msk [vmem:[%s4 + $0x3c] sm:$0xf] %vm804, %v755
  %821 = vst.msk [vmem:[%s4 + $0x40] sm:$0xf] %vm804, %v756
  %822 = vst.msk [vmem:[%s4 + $0x44] sm:$0xf] %vm804, %v757
  %823 = vst.msk [vmem:[%s4 + $0x48] sm:$0xf] %vm804, %v758
  %824 = vst.msk [vmem:[%s4 + $0x4c] sm:$0xf] %vm804, %v759
  %825 = vst.msk [vmem:[%s4 + $0x50] sm:$0xf] %vm804, %v760
  %826 = vst.msk [vmem:[%s4 + $0x54] sm:$0xf] %vm804, %v761
  %827 = vst.msk [vmem:[%s4 + $0x58] sm:$0xf] %vm804, %v762
  %828 = vst.msk [vmem:[%s4 + $0x5c] sm:$0xf] %vm804, %v763
  %829 = vst.msk [vmem:[%s4 + $0x60] sm:$0xf] %vm804, %v764
  %830 = vst.msk [vmem:[%s4 + $0x64] sm:$0xf] %vm804, %v765
  %831 = vst.msk [vmem:[%s4 + $0x68] sm:$0xf] %vm804, %v766
  %832 = vst.msk [vmem:[%s4 + $0x6c] sm:$0xf] %vm804, %v767
  %833 = vst.msk [vmem:[%s4 + $0x70] sm:$0xf] %vm804, %v768
  %834 = vst.msk [vmem:[%s4 + $0x74] sm:$0xf] %vm804, %v769
  %835 = vst.msk [vmem:[%s4 + $0x78] sm:$0xf] %vm804, %v770
  %836 = vst.msk [vmem:[%s4 + $0x7c] sm:$0xf] %vm804, %v771
  %837 = vst.msk [vmem:[%s4 + $0x80] sm:$0xf] %vm804, %v772
  %838 = vst.msk [vmem:[%s4 + $0x84] sm:$0xf] %vm804, %v773
  %839 = vst.msk [vmem:[%s4 + $0x88] sm:$0xf] %vm804, %v774
  %840 = vst.msk [vmem:[%s4 + $0x8c] sm:$0xf] %vm804, %v775
  %841 = vst.msk [vmem:[%s4 + $0x90] sm:$0xf] %vm804, %v776
  %842 = vst.msk [vmem:[%s4 + $0x94] sm:$0xf] %vm804, %v777
  %843 = vst.msk [vmem:[%s4 + $0x98] sm:$0xf] %vm804, %v778
  %844 = vst.msk [vmem:[%s4 + $0x9c] sm:$0xf] %vm804, %v779
  %845 = vst.msk [vmem:[%s4 + $0xa0] sm:$0xf] %vm804, %v780
  %846 = vst.msk [vmem:[%s4 + $0xa4] sm:$0xf] %vm804, %v781
  %847 = vst.msk [vmem:[%s4 + $0xa8] sm:$0xf] %vm804, %v782
  %848 = vst.msk [vmem:[%s4 + $0xac] sm:$0xf] %vm804, %v783
  %849 = vst.msk [vmem:[%s4 + $0xb0] sm:$0xf] %vm804, %v784
  %850 = vst.msk [vmem:[%s4 + $0xb4] sm:$0xf] %vm804, %v785
  %851 = vst.msk [vmem:[%s4 + $0xb8] sm:$0xf] %vm804, %v786
  %852 = vst.msk [vmem:[%s4 + $0xbc] sm:$0xf] %vm804, %v787
  %853 = vst.msk [vmem:[%s4 + $0xc0] sm:$0xf] %vm804, %v788
  %854 = vst.msk [vmem:[%s4 + $0xc4] sm:$0xf] %vm804, %v789
  %855 = vst.msk [vmem:[%s4 + $0xc8] sm:$0xf] %vm804, %v790
  %856 = vst.msk [vmem:[%s4 + $0xcc] sm:$0xf] %vm804, %v791
  %857 = vst.msk [vmem:[%s4 + $0xd0] sm:$0xf] %vm804, %v792
  %858 = vst.msk [vmem:[%s4 + $0xd4] sm:$0xf] %vm804, %v793
  %859 = vst.msk [vmem:[%s4 + $0xd8] sm:$0xf] %vm804, %v794
  %860 = vst.msk [vmem:[%s4 + $0xdc] sm:$0xf] %vm804, %v795
  %861 = vst.msk [vmem:[%s4 + $0xe0] sm:$0xf] %vm804, %v796
  %862 = vst.msk [vmem:[%s4 + $0xe4] sm:$0xf] %vm804, %v797
  %863 = vst.msk [vmem:[%s4 + $0xe8] sm:$0xf] %vm804, %v798
  %864 = vst.msk [vmem:[%s4 + $0xec] sm:$0xf] %vm804, %v799
  %865 = vst.msk [vmem:[%s4 + $0xf0] sm:$0xf] %vm804, %v800
  %866 = vst.msk [vmem:[%s4 + $0xf4] sm:$0xf] %vm804, %v801
  %867 = vst.msk [vmem:[%s4 + $0xf8] sm:$0xf] %vm804, %v802
  %868 = vst.msk [vmem:[%s4 + $0xfc] sm:$0xf] %vm804, %v803
  // Predicated region
  $region18: #{tpu_custom_call.1} parent=0 // pred_check
    _
  $region19: #{tpu_custom_call.1} parent=0 // pred_check_branch
    %870 = sbr.rel (0) target = $region21
  $region20: #{tpu_custom_call.1} parent=0 // pred_region
    _
  $region21: #{tpu_custom_call.1} parent=0 // pred_fallthru
    _
  // Predicated region
  $region22: #{tpu_custom_call.1} parent=0 // pred_check
    _
  $region23: #{tpu_custom_call.1} parent=0 // pred_check_branch
    %872 = sbr.rel (0) target = $region25
  $region24: #{tpu_custom_call.1} parent=0 // pred_region
    _
  $region25: #{tpu_custom_call.1} parent=0 // pred_fallthru
    _

</llo_original>
